<compile_context>
chip_gen: v5e
topology: v5e:2x2
jax: 0.10.0
libtpu: 0.0.40
codegen_flags: <defaults>
</compile_context>

<pallas_src>
import functools

import jax
import jax.numpy as jnp
from jax.experimental import pallas as pl
from jax.experimental.pallas import tpu as pltpu


# ----------------------------------------------------------------------------
# Pallas kernel: fused GroupNorm + folded (GN-affine * adaptive-affine)
# ----------------------------------------------------------------------------
def _agn_kernel(x_ref, scale_ref, shift_ref, o_ref, *, eps):
    # x_ref:     (1, TG, K)  one batch element x TG groups; K = (C/G)*D*H*W
    # scale_ref: (TG, K)     folded per-channel scale, pre-broadcast over spatial
    # shift_ref: (TG, K)     folded per-channel shift, pre-broadcast over spatial
    x = x_ref[...]
    mean = jnp.mean(x, axis=-1, keepdims=True)        # per-(n, g) mean (XLU)
    xc = x - mean
    var = jnp.mean(xc * xc, axis=-1, keepdims=True)   # biased variance (GroupNorm)
    inv = jax.lax.rsqrt(var + eps)                    # EUP transcendental
    o_ref[...] = (xc * inv) * scale_ref[...] + shift_ref[...]


def adaptive_group_norm_pallas(x, gn_weight, gn_bias, ada_weight, ada_bias,
                               num_groups, eps=1e-5):
    """x: (N, C, D, H, W) float32. gn_*/ada_*: per-channel (C,) params."""
    N, C = int(x.shape[0]), int(x.shape[1])
    G = int(num_groups)
    assert C % G == 0, "num_channels must be divisible by num_groups"
    Cg = C // G
    S = 1
    for d in x.shape[2:]:
        S *= int(d)
    K = Cg * S                                   # per-group reduction length

    x3 = x.reshape(N, G, K).astype(jnp.float32)  # lane-dense last dim

    # Fold GroupNorm affine and adaptive affine into one per-channel scale/shift.
    scale_c = (gn_weight * ada_weight).astype(jnp.float32)            # (C,)
    shift_c = (gn_bias * ada_weight + ada_bias).astype(jnp.float32)   # (C,)
    # Broadcast per-channel values over the spatial extent -> (G, K); this is
    # tiny (C * S floats) and read once per grid step, matching x's layout.
    scale_gk = jnp.repeat(scale_c.reshape(G, Cg), S, axis=1)
    shift_gk = jnp.repeat(shift_c.reshape(G, Cg), S, axis=1)

    # Group-tile size: multiple of 8 (sublane rule) or the full G dimension.
    TG = 8 if G % 8 == 0 else G
    grid = (N, G // TG)

    # Explicit VMEM budget: 4 blocks (x, scale, shift, out), double-buffered.
    blk_bytes = TG * K * 4
    need = 2 * 4 * blk_bytes
    vmem_limit = min(int(2 * need + (4 << 20)), 32 << 20)

    out3 = pl.pallas_call(
        functools.partial(_agn_kernel, eps=float(eps)),
        out_shape=jax.ShapeDtypeStruct((N, G, K), jnp.float32),
        grid=grid,
        in_specs=[
            pl.BlockSpec((1, TG, K), lambda n, gt: (n, gt, 0)),
            pl.BlockSpec((TG, K), lambda n, gt: (gt, 0)),
            pl.BlockSpec((TG, K), lambda n, gt: (gt, 0)),
        ],
        out_specs=pl.BlockSpec((1, TG, K), lambda n, gt: (n, gt, 0)),
        compiler_params=pltpu.CompilerParams(
            dimension_semantics=("parallel", "parallel"),
            vmem_limit_bytes=vmem_limit,
        ),
    )(x3, scale_gk, shift_gk)

    return out3.reshape(x.shape)


# ----------------------------------------------------------------------------
# Pure-JAX reference of the identical math (for correctness checking)
# ----------------------------------------------------------------------------
def adaptive_group_norm_reference(x, gn_weight, gn_bias, ada_weight, ada_bias,
                                  num_groups, eps=1e-5):
    N, C = x.shape[0], x.shape[1]
    G = num_groups
    xg = x.reshape(N, G, -1)
    mean = xg.mean(axis=-1, keepdims=True)
    var = ((xg - mean) ** 2).mean(axis=-1, keepdims=True)
    xhat = ((xg - mean) / jnp.sqrt(var + eps)).reshape(x.shape)
    bc = (1, C) + (1,) * (x.ndim - 2)
    y = xhat * gn_weight.reshape(bc) + gn_bias.reshape(bc)
    return y * ada_weight.reshape(bc) + ada_bias.reshape(bc)


# ----------------------------------------------------------------------------
if __name__ == "__main__":
    key = jax.random.PRNGKey(0)
    kx, kg, kb, kw, kab = jax.random.split(key, 5)

    # Small 5-D instantiation consistent with the module's (1, C, 1, 1, 1)
    # parameter shapes: x is (N, C, D, H, W).
    N, C, D, H, W = 2, 32, 4, 8, 8
    num_groups = 8

    x = jax.random.normal(kx, (N, C, D, H, W), jnp.float32)

    # Module init is weight=ones / bias=zeros (identity affine); use random
    # perturbations so the affine path is actually exercised. Forward-pass
    # semantics are unchanged (these are just parameter values).
    gn_weight = 1.0 + 0.1 * jax.random.normal(kg, (C,), jnp.float32)
    gn_bias = 0.1 * jax.random.normal(kb, (C,), jnp.float32)
    ada_weight = 1.0 + 0.1 * jax.random.normal(kw, (C,), jnp.float32)
    ada_bias = 0.1 * jax.random.normal(kab, (C,), jnp.float32)

    out = adaptive_group_norm_pallas(
        x, gn_weight, gn_bias, ada_weight, ada_bias, num_groups)
    out = jax.block_until_ready(out)
    assert out.shape == (N, C, D, H, W), out.shape

    ref = jax.block_until_ready(
        adaptive_group_norm_reference(
            x, gn_weight, gn_bias, ada_weight, ada_bias, num_groups))
    max_err = float(jnp.max(jnp.abs(out - ref)))
    assert jnp.allclose(out, ref, rtol=1e-3, atol=1e-3), max_err

    print("KERNEL_OK")
</pallas_src>

<mosaic_0001>
module attributes {stable_mosaic.version = 11 : i64} {
  func.func @_agn_kernel(%arg0: i32, %arg1: i32, %arg2: memref<1x8x1024xf32, #tpu.memory_space<vmem>>, %arg3: memref<8x1024xf32, #tpu.memory_space<vmem>>, %arg4: memref<8x1024xf32, #tpu.memory_space<vmem>>, %arg5: memref<1x8x1024xf32, #tpu.memory_space<vmem>>) attributes {dimension_semantics = [#tpu.dimension_semantics<parallel>, #tpu.dimension_semantics<parallel>], iteration_bounds = array<i64: 2, 1>, scalar_prefetch = 0 : i64, scratch_operands = 0 : i64, tpu.core_type = #tpu.core_type<tc>, window_params = [{transform_indices = @transform_0, window_bounds = array<i64: 1, 8, 1024>}, {transform_indices = @transform_1, window_bounds = array<i64: 8, 1024>}, {transform_indices = @transform_2, window_bounds = array<i64: 8, 1024>}, {transform_indices = @transform_3, window_bounds = array<i64: 1, 8, 1024>}]} {
    %c0 = arith.constant 0 : index
    %c0_0 = arith.constant 0 : index
    %c0_1 = arith.constant 0 : index
    %0 = vector.load %arg2[%c0, %c0_0, %c0_1] : memref<1x8x1024xf32, #tpu.memory_space<vmem>>, vector<1x8x1024xf32>
    %cst = arith.constant dense<0.000000e+00> : vector<1x8xf32>
    %1 = vector.multi_reduction <add>, %0, %cst [2] : vector<1x8x1024xf32> to vector<1x8xf32>
    %2 = vector.shape_cast %1 : vector<1x8xf32> to vector<1x8x1xf32>
    %cst_2 = arith.constant 1.024000e+03 : f32
    %3 = vector.broadcast %cst_2 : f32 to vector<1x8x1xf32>
    %4 = arith.divf %2, %3 : vector<1x8x1xf32>
    %5 = vector.broadcast %4 : vector<1x8x1xf32> to vector<1x8x1024xf32>
    %6 = arith.subf %0, %5 : vector<1x8x1024xf32>
    %7 = arith.mulf %6, %6 : vector<1x8x1024xf32>
    %cst_3 = arith.constant dense<0.000000e+00> : vector<1x8xf32>
    %8 = vector.multi_reduction <add>, %7, %cst_3 [2] : vector<1x8x1024xf32> to vector<1x8xf32>
    %9 = vector.shape_cast %8 : vector<1x8xf32> to vector<1x8x1xf32>
    %cst_4 = arith.constant 1.024000e+03 : f32
    %10 = vector.broadcast %cst_4 : f32 to vector<1x8x1xf32>
    %11 = arith.divf %9, %10 : vector<1x8x1xf32>
    %cst_5 = arith.constant 9.99999974E-6 : f32
    %12 = vector.broadcast %cst_5 : f32 to vector<1x8x1xf32>
    %13 = arith.addf %11, %12 : vector<1x8x1xf32>
    %14 = math.rsqrt %13 : vector<1x8x1xf32>
    %15 = vector.broadcast %14 : vector<1x8x1xf32> to vector<1x8x1024xf32>
    %16 = arith.mulf %6, %15 : vector<1x8x1024xf32>
    %c0_6 = arith.constant 0 : index
    %c0_7 = arith.constant 0 : index
    %17 = vector.load %arg3[%c0_6, %c0_7] : memref<8x1024xf32, #tpu.memory_space<vmem>>, vector<8x1024xf32>
    %18 = vector.shape_cast %17 : vector<8x1024xf32> to vector<1x8x1024xf32>
    %19 = arith.mulf %16, %18 : vector<1x8x1024xf32>
    %c0_8 = arith.constant 0 : index
    %c0_9 = arith.constant 0 : index
    %20 = vector.load %arg4[%c0_8, %c0_9] : memref<8x1024xf32, #tpu.memory_space<vmem>>, vector<8x1024xf32>
    %21 = vector.shape_cast %20 : vector<8x1024xf32> to vector<1x8x1024xf32>
    %22 = arith.addf %19, %21 : vector<1x8x1024xf32>
    %c0_10 = arith.constant 0 : index
    %c0_11 = arith.constant 0 : index
    %c0_12 = arith.constant 0 : index
    %23 = vector.load %arg5[%c0_10, %c0_11, %c0_12] : memref<1x8x1024xf32, #tpu.memory_space<vmem>>, vector<1x8x1024xf32>
    tpu.vector_store %arg5[%c0_10, %c0_11, %c0_12], %22 {strides = array<i32>} : memref<1x8x1024xf32, #tpu.memory_space<vmem>>, vector<1x8x1024xf32>,
    return
  }
  func.func @transform_0(%arg0: i32, %arg1: i32) -> (i32, i32, i32) {
    %c0_i32 = arith.constant 0 : i32
    %c0_i32_0 = arith.constant 0 : i32
    return %arg0, %arg1, %c0_i32 : i32, i32, i32
  }
  func.func @transform_1(%arg0: i32, %arg1: i32) -> (i32, i32) {
    %c0_i32 = arith.constant 0 : i32
    %c0_i32_0 = arith.constant 0 : i32
    return %arg1, %c0_i32 : i32, i32
  }
  func.func @transform_2(%arg0: i32, %arg1: i32) -> (i32, i32) {
    %c0_i32 = arith.constant 0 : i32
    %c0_i32_0 = arith.constant 0 : i32
    return %arg1, %c0_i32 : i32, i32
  }
  func.func @transform_3(%arg0: i32, %arg1: i32) -> (i32, i32, i32) {
    %c0_i32 = arith.constant 0 : i32
    %c0_i32_0 = arith.constant 0 : i32
    return %arg0, %arg1, %c0_i32 : i32, i32, i32
  }
}

</mosaic_0001>

<llo_original>
// kernel: tpu_custom_call.1
$region0: #{tpu_custom_call.1}
  #allocation0 [shape = 'u32[]', space=smem, size = 0x4, offset = 0x4, fixed_abs, tag = 'smem constant byte address 0x4 - core index']
  #allocation1 [shape = 'u32[72,128]{1,0:T(1,128)}', space=vmem, size = 0x9000, scoped, tag = 'internal scratch']
  %s0 = inlined_call_operand.hbm [shape: f32[2,8,1024], index: 0, kind: input, shape index: {}]
  %s1 = inlined_call_operand.hbm [shape: f32[8,1024], index: 1, kind: input, shape index: {}]
  %s2 = inlined_call_operand.hbm [shape: f32[8,1024], index: 2, kind: input, shape index: {}]
  %s3 = inlined_call_operand.hbm [shape: f32[2,8,1024], index: 3, kind: output, shape index: {}]
  %s4 = sld [smem:[#allocation0]]
  $region57: #{tpu_custom_call.1} parent=0
    _
  %s6 = ssub.s32 1, %s4
  %s7 = scalar_select 0, %s6, %s4
  $region1: #{tpu_custom_call.1} parent=0
    #allocation2 [shape = 'u8[65536]{0}', space=vmem, size = 0x10000, scoped, tag = 'input window, operand 0']
    #allocation3 [shape = 's32[2]{0}', space=sflag, size = 0x8, scoped, tag = 'scoped memory for tpu_custom_call.1']
    #allocation4 [shape = 's32[2]{0}', space=sflag, size = 0x8, scoped, tag = 'scoped memory for tpu_custom_call.1']
    #allocation5 [shape = 'u8[32768]{0}', space=vmem, size = 0x8000, scoped, tag = 'input window, operand 1, single buffered']
    #allocation6 [shape = 's32[1]{0}', space=sflag, size = 0x4, scoped, tag = 'scoped memory for tpu_custom_call.1']
    #allocation7 [shape = 'u8[32768]{0}', space=vmem, size = 0x8000, scoped, tag = 'input window, operand 2, single buffered']
    #allocation8 [shape = 'u8[65536]{0}', space=vmem, size = 0x10000, scoped, tag = 'output window, operand 0']
    %8 = vsyncpa [#allocation3], 0
    %s9 = scalar_lea.sflag [#allocation3], 1
    %10 = vsyncpa %s9, 0
    %11 = vsyncpa [#allocation6], 0
    %12 = vsyncpa [#allocation4], 0
    %s13 = scalar_lea.sflag [#allocation4], 1
    %14 = vsyncpa %s13, 0
    loop: start=0, step=1, limit=4
    $region2: #{tpu_custom_call.1} parent=1 // loop_pre_header
      _
    $region3: #{tpu_custom_call.1} parent=1 // loop_header
      %s16 = sphi 0, %s20
      %p17 = scmp.ge.s32.totalorder %s16, 4
      %s23 = sphi 0, %s35
      %s24 = sphi 0, %s31
      %s25 = sphi 0, %s23
      %s26 = sphi 0, %s24
      %s27 = sphi 0, %s25
      %s28 = sphi 0, %s26
      %s40 = sphi 0, %s42
      %s43 = sphi 0, %s40
      %s44 = sphi 0, %s43
      %s60 = sphi 0, %s44
      %s66 = sphi 0, %s68
      %s69 = sphi 0, %s66
      %s70 = sphi 0, %s69
      %s86 = sphi 0, %s70
      %s92 = sphi 0, %s94
      %s95 = sphi 0, %s92
      %s96 = sphi 0, %s95
      %s112 = sphi 0, %s96
      %s120 = sphi 0, %s122
      %s123 = sphi 0, %s120
      %s124 = sphi 0, %s123
      %s140 = sphi 0, %s124
    $region4: #{tpu_custom_call.1} parent=1 // loop_header_branch
      %19 = sbr.rel (%p17) target = $region8
    $region5: #{tpu_custom_call.1} parent=1 // loop_body
      %s21 = ssub.s32 %s16, 1
      %s22 = ssub.s32 %s16, 2
      %s29 = sadd.s32 1, %s24
      %p30 = scmp.ge.s32.totalorder %s29, 1
      %s31 = scalar_select %p30, 0, %s29
      %s32 = sadd.s32 1, %s23
      %s33 = scalar_select %p30, %s32, %s23
      %p34 = scmp.ge.s32.totalorder %s33, 2
      %s35 = scalar_select %p34, 0, %s33
      %s36 = ssub.s32 %s23, %s35
      %s37 = ssub.s32 %s24, %s31
      %s38 = sor.u32 %s36, %s37
      %p39 = scmp.eq.s32.totalorder %s38, 0
      %s41 = sadd.s32 %s40, 1
      %s42 = scalar_select %p39, %s40, %s41
      %p45 = pneg %p39
      %p46 = scmp.eq.s32.totalorder %s16, 1
      %p47 = por %p45, %p46
      %p48 = scmp.ne.s32.totalorder %s40, %s43
      %p49 = scmp.eq.s32.totalorder %s16, 0
      %p50 = por %p48, %p49
      %p51 = scmp.ne.s32.totalorder %s40, %s43
      %p52 = scmp.eq.s32.totalorder %s21, 1
      %p53 = por %p51, %p52
      %p54 = scmp.ne.s32.totalorder %s43, %s44
      %p55 = scmp.eq.s32.totalorder %s21, 0
      %p56 = por %p54, %p55
      %p57 = scmp.ne.s32.totalorder %s43, %s44
      %p58 = scmp.eq.s32.totalorder %s22, 1
      %p59 = por %p57, %p58
      %p61 = scmp.ne.s32.totalorder %s44, %s60
      %p62 = scmp.eq.s32.totalorder %s22, 0
      %p63 = por %p61, %p62
      %s64 = ssub.s32 %s24, %s31
      %p65 = scmp.eq.s32.totalorder %s64, 0
      %s67 = sadd.s32 %s66, 1
      %s68 = scalar_select %p65, %s66, %s67
      %p71 = pneg %p65
      %p72 = scmp.eq.s32.totalorder %s16, 1
      %p73 = por %p71, %p72
      %p74 = scmp.ne.s32.totalorder %s66, %s69
      %p75 = scmp.eq.s32.totalorder %s16, 0
      %p76 = por %p74, %p75
      %p77 = scmp.ne.s32.totalorder %s66, %s69
      %p78 = scmp.eq.s32.totalorder %s21, 1
      %p79 = por %p77, %p78
      %p80 = scmp.ne.s32.totalorder %s69, %s70
      %p81 = scmp.eq.s32.totalorder %s21, 0
      %p82 = por %p80, %p81
      %p83 = scmp.ne.s32.totalorder %s69, %s70
      %p84 = scmp.eq.s32.totalorder %s22, 1
      %p85 = por %p83, %p84
      %p87 = scmp.ne.s32.totalorder %s70, %s86
      %p88 = scmp.eq.s32.totalorder %s22, 0
      %p89 = por %p87, %p88
      %s90 = ssub.s32 %s24, %s31
      %p91 = scmp.eq.s32.totalorder %s90, 0
      %s93 = sadd.s32 %s92, 1
      %s94 = scalar_select %p91, %s92, %s93
      %p97 = pneg %p91
      %p98 = scmp.eq.s32.totalorder %s16, 1
      %p99 = por %p97, %p98
      %p100 = scmp.ne.s32.totalorder %s92, %s95
      %p101 = scmp.eq.s32.totalorder %s16, 0
      %p102 = por %p100, %p101
      %p103 = scmp.ne.s32.totalorder %s92, %s95
      %p104 = scmp.eq.s32.totalorder %s21, 1
      %p105 = por %p103, %p104
      %p106 = scmp.ne.s32.totalorder %s95, %s96
      %p107 = scmp.eq.s32.totalorder %s21, 0
      %p108 = por %p106, %p107
      %p109 = scmp.ne.s32.totalorder %s95, %s96
      %p110 = scmp.eq.s32.totalorder %s22, 1
      %p111 = por %p109, %p110
      %p113 = scmp.ne.s32.totalorder %s96, %s112
      %p114 = scmp.eq.s32.totalorder %s22, 0
      %p115 = por %p113, %p114
      %s116 = ssub.s32 %s23, %s35
      %s117 = ssub.s32 %s24, %s31
      %s118 = sor.u32 %s116, %s117
      %p119 = scmp.eq.s32.totalorder %s118, 0
      %s121 = sadd.s32 %s120, 1
      %s122 = scalar_select %p119, %s120, %s121
      %p125 = pneg %p119
      %p126 = scmp.eq.s32.totalorder %s16, 1
      %p127 = por %p125, %p126
      %p128 = scmp.ne.s32.totalorder %s120, %s123
      %p129 = scmp.eq.s32.totalorder %s16, 0
      %p130 = por %p128, %p129
      %p131 = scmp.ne.s32.totalorder %s120, %s123
      %p132 = scmp.eq.s32.totalorder %s21, 1
      %p133 = por %p131, %p132
      %p134 = scmp.ne.s32.totalorder %s123, %s124
      %p135 = scmp.eq.s32.totalorder %s21, 0
      %p136 = por %p134, %p135
      %p137 = scmp.ne.s32.totalorder %s123, %s124
      %p138 = scmp.eq.s32.totalorder %s22, 1
      %p139 = por %p137, %p138
      %p141 = scmp.ne.s32.totalorder %s124, %s140
      %p142 = scmp.eq.s32.totalorder %s22, 0
      %p143 = por %p141, %p142
      %p144 = scmp.le.s32.totalorder 1, %s16
      %p145 = scmp.lt.s32.totalorder %s16, 3
      %p146 = pnand %p144, %p145
      %p147 = pneg %p146
      // Predicated region
      $region9: #{tpu_custom_call.1} parent=5 // pred_check
        _
      $region10: #{tpu_custom_call.1} parent=5 // pred_check_branch
        %149 = sbr.rel (%p146) target = $region12
      $region11: #{tpu_custom_call.1} parent=5 // pred_region
        %s150 = ssub.s32 %s16, 1
        // Predicated region
        $region13: #{tpu_custom_call.1} parent=11 // pred_check
          %p151 = pneg %p82
        $region14: #{tpu_custom_call.1} parent=11 // pred_check_branch
          %153 = sbr.rel (%p151) target = $region16
        $region15: #{tpu_custom_call.1} parent=11 // pred_region
          %155 = vsyncadd [#allocation6], 0
          %s156 = smul.addr %s26, 8
          %s157 = smul.addr %s156, 8
          %s158 = scalar_lea.hbm %s1, %s157
          %s160 = sshll.u32 %s158, 4
          %s161 = int_to_ptr.hbm [resolvable:$true] %s160
          %s162 = sshll.u32 [#allocation5], 4
          %s163 = int_to_ptr.vmem [resolvable:$true] %s162
          %165 = dma.hbm_to_vmem [thread:$0]  %s161, 1024, %s163, [#allocation6]
        $region16: #{tpu_custom_call.1} parent=11 // pred_fallthru
          _
        // Predicated region
        $region17: #{tpu_custom_call.1} parent=11 // pred_check
          %p166 = pneg %p108
        $region18: #{tpu_custom_call.1} parent=11 // pred_check_branch
          %168 = sbr.rel (%p166) target = $region20
        $region19: #{tpu_custom_call.1} parent=11 // pred_region
          %170 = vsyncadd [#allocation6], 0
          %s171 = smul.addr %s26, 8
          %s172 = smul.addr %s171, 8
          %s173 = scalar_lea.hbm %s2, %s172
          %s175 = sshll.u32 %s173, 4
          %s176 = int_to_ptr.hbm [resolvable:$true] %s175
          %s177 = sshll.u32 [#allocation7], 4
          %s178 = int_to_ptr.vmem [resolvable:$true] %s177
          %180 = dma.hbm_to_vmem [thread:$0]  %s176, 1024, %s178, [#allocation6]
        $region20: #{tpu_custom_call.1} parent=11 // pred_fallthru
          _
      $region12: #{tpu_custom_call.1} parent=5 // pred_fallthru
        _
      %p181 = scmp.lt.s32.totalorder %s16, 2
      // Predicated region
      $region21: #{tpu_custom_call.1} parent=5 // pred_check
        %p182 = pneg %p181
      $region22: #{tpu_custom_call.1} parent=5 // pred_check_branch
        %184 = sbr.rel (%p182) target = $region24
      $region23: #{tpu_custom_call.1} parent=5 // pred_region
        // Predicated region
        $region25: #{tpu_custom_call.1} parent=23 // pred_check
          %p185 = pneg %p50
        $region26: #{tpu_custom_call.1} parent=23 // pred_check_branch
          %187 = sbr.rel (%p185) target = $region28
        $region27: #{tpu_custom_call.1} parent=23 // pred_region
          %s188 = sand.u32 %s40, 1
          %s189 = scalar_lea.sflag [#allocation3], %s188
          %s190 = sand.u32 %s40, 1
          %s191 = smul.addr %s190, 64
          %s192 = scalar_lea.vmem [#allocation2], %s191
          %194 = vsyncadd %s189, 0
          %s195 = smul.addr %s24, 8
          %s196 = smul.addr %s23, 8
          %s197 = sadd.s32 %s195, %s196
          %s198 = smul.addr %s197, 8
          %s199 = scalar_lea.hbm %s0, %s198
          %s201 = sshll.u32 %s199, 4
          %s202 = int_to_ptr.hbm [resolvable:$true] %s201
          %s203 = sshll.u32 %s192, 4
          %s204 = int_to_ptr.vmem [resolvable:$true] %s203
          %206 = dma.hbm_to_vmem [thread:$0]  %s202, 1024, %s204, %s189
        $region28: #{tpu_custom_call.1} parent=23 // pred_fallthru
          _
      $region24: #{tpu_custom_call.1} parent=5 // pred_fallthru
        _
      %p207 = scmp.le.s32.totalorder 1, %s16
      %p208 = scmp.lt.s32.totalorder %s16, 3
      %p209 = pnand %p207, %p208
      %p210 = pneg %p209
      // Predicated region
      $region29: #{tpu_custom_call.1} parent=5 // pred_check
        _
      $region30: #{tpu_custom_call.1} parent=5 // pred_check_branch
        %212 = sbr.rel (%p209) target = $region32
      $region31: #{tpu_custom_call.1} parent=5 // pred_region
        %s213 = ssub.s32 %s16, 1
        %s214 = sand.u32 %s43, 1
        %s215 = scalar_lea.sflag [#allocation3], %s214
        %s216 = sand.u32 %s43, 1
        %s217 = smul.addr %s216, 64
        %s218 = scalar_lea.vmem [#allocation2], %s217
        // Predicated region
        $region33: #{tpu_custom_call.1} parent=31 // pred_check
          %p219 = pneg %p56
        $region34: #{tpu_custom_call.1} parent=31 // pred_check_branch
          %221 = sbr.rel (%p219) target = $region36
        $region35: #{tpu_custom_call.1} parent=31 // pred_region
          %223 = dma.done %s215, 1024
        $region36: #{tpu_custom_call.1} parent=31 // pred_fallthru
          _
        // Predicated region
        $region37: #{tpu_custom_call.1} parent=31 // pred_check
          %p224 = pneg %p82
        $region38: #{tpu_custom_call.1} parent=31 // pred_check_branch
          %226 = sbr.rel (%p224) target = $region40
        $region39: #{tpu_custom_call.1} parent=31 // pred_region
          %228 = dma.done [#allocation6], 1024
        $region40: #{tpu_custom_call.1} parent=31 // pred_fallthru
          _
        // Predicated region
        $region41: #{tpu_custom_call.1} parent=31 // pred_check
          %p229 = pneg %p108
        $region42: #{tpu_custom_call.1} parent=31 // pred_check_branch
          %231 = sbr.rel (%p229) target = $region44
        $region43: #{tpu_custom_call.1} parent=31 // pred_region
          %233 = dma.done [#allocation6], 1024
        $region44: #{tpu_custom_call.1} parent=31 // pred_fallthru
          _
        %s234 = sand.u32 %s43, 1
        %s235 = scalar_lea.sflag [#allocation3], %s234
        %s236 = sand.u32 %s43, 1
        %s237 = smul.addr %s236, 64
        %s238 = scalar_lea.vmem [#allocation2], %s237
        %p239 = pneg %p56
        %p240 = pneg %p53
        %p241 = pneg %p82
        %p242 = pneg %p79
        %p243 = pneg %p108
        %p244 = pneg %p105
        %p245 = pneg %p136
        %p246 = pneg %p133
        %s247 = sand.u32 %s123, 1
        %s248 = scalar_lea.sflag [#allocation4], %s247
        %s249 = sand.u32 %s123, 1
        %s250 = smul.addr %s249, 64
        %s251 = scalar_lea.vmem [#allocation8], %s250
        %v252 = vld [vmem:[%s218] sm:$0xff]
        %v253 = vld [vmem:[%s218 + $0x8] sm:$0xff]
        %v254 = vld [vmem:[%s218 + $0x10] sm:$0xff]
        %v255 = vld [vmem:[%s218 + $0x18] sm:$0xff]
        %v256 = vld [vmem:[%s218 + $0x20] sm:$0xff]
        %v257 = vld [vmem:[%s218 + $0x28] sm:$0xff]
        %v258 = vld [vmem:[%s218 + $0x30] sm:$0xff]
        %v259 = vld [vmem:[%s218 + $0x38] sm:$0xff]
        %v260 = vadd.f32 %v252, %v253
        %v261 = vadd.f32 %v260, %v254
        %v262 = vadd.f32 %v261, %v255
        %v263 = vadd.f32 %v262, %v256
        %v264 = vadd.f32 %v263, %v257
        %v265 = vadd.f32 %v264, %v258
        %v266 = vadd.f32 %v265, %v259
        %267 = vadd.xlane.f32.xlu0 %v266
        %v268 = vpop.xlane.xlu0 %267
        %v269 = vrcp.pop 1024.0
        %v270 = vmul.f32 1024.0, %v269
        %v271 = vsub.f32 1.0, %v270
        %v272 = vmul.f32 %v269, %v271
        %v273 = vadd.f32 %v269, %v272
        %vm274 = vweird.f32 %v269
        %v275 = vsel %vm274, %v269, %v273
        %v276 = vmul.f32 %v268, %v275
        %v277 = vsub.f32 %v252, %v276
        %v278 = vsub.f32 %v253, %v276
        %v279 = vsub.f32 %v254, %v276
        %v280 = vsub.f32 %v255, %v276
        %v281 = vsub.f32 %v256, %v276
        %v282 = vsub.f32 %v257, %v276
        %v283 = vsub.f32 %v258, %v276
        %v284 = vsub.f32 %v259, %v276
        %v285 = vmul.f32 %v277, %v277
        %v286 = vmul.f32 %v278, %v278
        %v287 = vmul.f32 %v279, %v279
        %v288 = vmul.f32 %v280, %v280
        %v289 = vmul.f32 %v281, %v281
        %v290 = vmul.f32 %v282, %v282
        %v291 = vmul.f32 %v283, %v283
        %v292 = vmul.f32 %v284, %v284
        %v293 = vadd.f32 %v285, %v286
        %v294 = vadd.f32 %v293, %v287
        %v295 = vadd.f32 %v294, %v288
        %v296 = vadd.f32 %v295, %v289
        %v297 = vadd.f32 %v296, %v290
        %v298 = vadd.f32 %v297, %v291
        %v299 = vadd.f32 %v298, %v292
        %300 = vadd.xlane.f32.xlu0 %v299
        %v301 = vpop.xlane.xlu0 %300
        %v302 = vmul.f32 %v301, %v275
        %v303 = vadd.f32 %v302, 1e-05
        %v304 = vrsqrt.pop %v303
        %v305 = vmul.f32 %v304, %v303
        %v306 = vmul.f32 %v305, %v304
        %v307 = vmul.f32 0.5, %v306
        %v308 = vsub.f32 1.5, %v307
        %v309 = vmul.f32 %v304, %v308
        %vm310 = vweird.f32 %v303
        %vm311 = vweird.f32 %v304
        %vm312 = vmor %vm310, %vm311
        %v313 = vsel %vm312, %v304, %v309
        %v314 = vmul.f32 %v277, %v313
        %v315 = vmul.f32 %v278, %v313
        %v316 = vmul.f32 %v279, %v313
        %v317 = vmul.f32 %v280, %v313
        %v318 = vmul.f32 %v281, %v313
        %v319 = vmul.f32 %v282, %v313
        %v320 = vmul.f32 %v283, %v313
        %v321 = vmul.f32 %v284, %v313
        %v322 = vld [vmem:[#allocation5] sm:$0xff]
        %v323 = vld [vmem:[#allocation5 + $0x8] sm:$0xff]
        %v324 = vld [vmem:[#allocation5 + $0x10] sm:$0xff]
        %v325 = vld [vmem:[#allocation5 + $0x18] sm:$0xff]
        %v326 = vld [vmem:[#allocation5 + $0x20] sm:$0xff]
        %v327 = vld [vmem:[#allocation5 + $0x28] sm:$0xff]
        %v328 = vld [vmem:[#allocation5 + $0x30] sm:$0xff]
        %v329 = vld [vmem:[#allocation5 + $0x38] sm:$0xff]
        %v330 = vmul.f32 %v314, %v322
        %v331 = vmul.f32 %v315, %v323
        %v332 = vmul.f32 %v316, %v324
        %v333 = vmul.f32 %v317, %v325
        %v334 = vmul.f32 %v318, %v326
        %v335 = vmul.f32 %v319, %v327
        %v336 = vmul.f32 %v320, %v328
        %v337 = vmul.f32 %v321, %v329
        %v338 = vld [vmem:[#allocation7] sm:$0xff]
        %v339 = vld [vmem:[#allocation7 + $0x8] sm:$0xff]
        %v340 = vld [vmem:[#allocation7 + $0x10] sm:$0xff]
        %v341 = vld [vmem:[#allocation7 + $0x18] sm:$0xff]
        %v342 = vld [vmem:[#allocation7 + $0x20] sm:$0xff]
        %v343 = vld [vmem:[#allocation7 + $0x28] sm:$0xff]
        %v344 = vld [vmem:[#allocation7 + $0x30] sm:$0xff]
        %v345 = vld [vmem:[#allocation7 + $0x38] sm:$0xff]
        %v346 = vadd.f32 %v330, %v338
        %v347 = vadd.f32 %v331, %v339
        %v348 = vadd.f32 %v332, %v340
        %v349 = vadd.f32 %v333, %v341
        %v350 = vadd.f32 %v334, %v342
        %v351 = vadd.f32 %v335, %v343
        %v352 = vadd.f32 %v336, %v344
        %v353 = vadd.f32 %v337, %v345
        %354 = vst [vmem:[%s251] sm:$0xff] %v346
        %355 = vst [vmem:[%s251 + $0x8] sm:$0xff] %v347
        %356 = vst [vmem:[%s251 + $0x10] sm:$0xff] %v348
        %357 = vst [vmem:[%s251 + $0x18] sm:$0xff] %v349
        %358 = vst [vmem:[%s251 + $0x20] sm:$0xff] %v350
        %359 = vst [vmem:[%s251 + $0x28] sm:$0xff] %v351
        %360 = vst [vmem:[%s251 + $0x30] sm:$0xff] %v352
        %361 = vst [vmem:[%s251 + $0x38] sm:$0xff] %v353
        %s362 = sand.u32 %s123, 1
        %s363 = scalar_lea.sflag [#allocation4], %s362
        %s364 = sand.u32 %s123, 1
        %s365 = smul.addr %s364, 64
        %s366 = scalar_lea.vmem [#allocation8], %s365
        // Predicated region
        $region45: #{tpu_custom_call.1} parent=31 // pred_check
          %p367 = pneg %p133
        $region46: #{tpu_custom_call.1} parent=31 // pred_check_branch
          %369 = sbr.rel (%p367) target = $region48
        $region47: #{tpu_custom_call.1} parent=31 // pred_region
          %371 = vsyncadd %s363, 0
          %s372 = smul.addr %s26, 8
          %s373 = smul.addr %s25, 8
          %s374 = sadd.s32 %s372, %s373
          %s375 = smul.addr %s374, 8
          %s376 = scalar_lea.hbm %s3, %s375
          %s378 = sshll.u32 %s366, 4
          %s379 = int_to_ptr.vmem [resolvable:$true] %s378
          %s380 = sshll.u32 %s376, 4
          %s381 = int_to_ptr.hbm [resolvable:$true] %s380
          %383 = dma.vmem_to_hbm [thread:$0]  %s379, 1024, %s381, %s363
        $region48: #{tpu_custom_call.1} parent=31 // pred_fallthru
          _
      $region32: #{tpu_custom_call.1} parent=5 // pred_fallthru
        _
      %p384 = scmp.le.s32.totalorder 2, %s16
      // Predicated region
      $region49: #{tpu_custom_call.1} parent=5 // pred_check
        %p385 = pneg %p384
      $region50: #{tpu_custom_call.1} parent=5 // pred_check_branch
        %387 = sbr.rel (%p385) target = $region52
      $region51: #{tpu_custom_call.1} parent=5 // pred_region
        %s388 = ssub.s32 %s16, 2
        // Predicated region
        $region53: #{tpu_custom_call.1} parent=51 // pred_check
          %p389 = pneg %p139
        $region54: #{tpu_custom_call.1} parent=51 // pred_check_branch
          %391 = sbr.rel (%p389) target = $region56
        $region55: #{tpu_custom_call.1} parent=51 // pred_region
          %s392 = sand.u32 %s124, 1
          %s393 = scalar_lea.sflag [#allocation4], %s392
          %s394 = sand.u32 %s124, 1
          %s395 = smul.addr %s394, 64
          %s396 = scalar_lea.vmem [#allocation8], %s395
          %398 = dma.done %s393, 1024
        $region56: #{tpu_custom_call.1} parent=51 // pred_fallthru
          _
      $region52: #{tpu_custom_call.1} parent=5 // pred_fallthru
        _
    $region6: #{tpu_custom_call.1} parent=1 // loop_footer
      %s20 = sadd.s32 1, %s16
    $region7: #{tpu_custom_call.1} parent=1 // loop_footer_branch
      %15 = sbr.rel target = $region3
    $region8: #{tpu_custom_call.1} parent=1 // loop_exit
      _
    %399 = vsyncpa [#allocation3], 1
    %s400 = scalar_lea.sflag [#allocation3], 1
    %401 = vsyncpa %s400, 1
    %402 = vsyncpa [#allocation6], 1
    %403 = vsyncpa [#allocation4], 1
    %s404 = scalar_lea.sflag [#allocation4], 1
    %405 = vsyncpa %s404, 1

</llo_original>
